<compile_context>
chip_gen: v6e
topology: v6e:2x2x1
jax: 0.10.0
libtpu: 0.0.40
codegen_flags: <defaults>
</compile_context>

<pallas_src>
import functools

import jax
import jax.numpy as jnp
from jax.experimental import pallas as pl
from jax.experimental.pallas import tpu as pltpu


def _block_kernel(*refs, has_film):
    if has_film:
        x_ref, w_ref, bg_ref, film_ref, o_ref = refs
    else:
        x_ref, w_ref, bg_ref, o_ref = refs
        film_ref = None

    # x_ref:    (1, 1, TH+2, W, 3*Cin) bf16  row-tile with 2-row halo, kx folded
    # w_ref:    (3, 3*Cin, Cout)       bf16  folded conv weights (ky-major)
    # bg_ref:   (2, Cout)              f32   row 0 = conv bias, row 1 = RMSNorm gain
    # film_ref: (1, 2, Cout)           f32   [0]=scale, [1]=shift   (only if has_film)
    # o_ref:    (1, TH, W, Cout)       f32
    _, TH, W, Cout = o_ref.shape
    K3 = x_ref.shape[-1]  # 3 * Cin

    # 3x3 conv as 3 row-offset bf16 MXU matmuls with f32 accumulation.
    acc = jnp.zeros((TH * W, Cout), jnp.float32)
    for ky in range(3):
        win = x_ref[0, 0, ky:ky + TH, :, :].reshape(TH * W, K3)  # layout-preserving
        acc = acc + jnp.dot(win, w_ref[ky], preferred_element_type=jnp.float32)
    acc = acc + bg_ref[0:1, :]                                   # conv bias

    # RMSNorm over channels: x / max(||x||, 1e-12) * g * sqrt(Cout)  (single rsqrt).
    sumsq = jnp.sum(acc * acc, axis=-1, keepdims=True)
    inv = jax.lax.rsqrt(jnp.maximum(sumsq, 1e-24))
    y = acc * inv * (bg_ref[1:2, :] * (float(Cout) ** 0.5))

    # Optional FiLM: y * (scale + 1) + shift.
    if has_film:
        y = y * (film_ref[0, 0:1, :] + 1.0) + film_ref[0, 1:2, :]

    # SiLU = y * sigmoid(y); exp + approx reciprocal both use the EUP slot.
    y = y * pl.reciprocal(1.0 + jnp.exp(-y), approx=True)

    # Single lane-contiguous store of the whole (TH, W, Cout) slab.
    o_ref[...] = y.reshape(1, TH, W, Cout).astype(o_ref.dtype)


def block_forward(x, conv_w, conv_b, g, scale_shift=None, row_tile=None):
    """Pallas equivalent of Block.forward.

    x:       (B, Cin, H, W) NCHW (PyTorch layout).
    conv_w:  (Cout, Cin, 3, 3), conv_b: (Cout,)
    g:       RMSNorm gain with Cout elements (e.g. shape (1, Cout, 1, 1)).
    scale_shift: optional (scale, shift), each with B*Cout elements.
    returns: (B, Cout, H, W) float32.
    """
    B, Cin, H, W = x.shape
    Cout = conv_w.shape[0]
    has_film = scale_shift is not None

    # ---- layout glue in plain XLA ------------------------------------------------
    Wp = -(-W // 8) * 8                       # pad W to sublane multiple
    if row_tile is None:
        # ~4K output pixels per grid step: low vreg/VMEM pressure, many pipeline
        # steps / megacore work items even at batch 1.
        row_tile = max(1, min(H, 4096 // Wp))
    nR = -(-H // row_tile)
    Hp = nR * row_tile

    xf = jnp.transpose(x, (0, 2, 3, 1)).astype(jnp.float32)          # NHWC
    # 1-pixel conv zero pad + extra bottom/right zeros up to (Hp, Wp).
    x_padded = jnp.pad(xf, ((0, 0), (1, Hp + 1 - H), (1, Wp + 1 - W), (0, 0)))
    # Fold the 3 horizontal taps into channels: (B, Hp+2, Wp, 3*Cin).
    x_fold = jnp.concatenate(
        [x_padded[:, :, kx:kx + Wp, :] for kx in range(3)], axis=-1)
    # Overlapping row windows (2-row halo) -> plain Blocked specs, no halo tricks.
    x_tiles = jnp.stack(
        [x_fold[:, r * row_tile:r * row_tile + row_tile + 2] for r in range(nR)],
        axis=1).astype(jnp.bfloat16)          # (B, nR, TH+2, Wp, 3*Cin)

    # Folded weights: w_fold[ky, kx*Cin + cin, cout] = conv_w[cout, cin, ky, kx].
    w_fold = jnp.transpose(conv_w.astype(jnp.float32),
                           (2, 3, 1, 0)).reshape(3, 3 * Cin, Cout).astype(jnp.bfloat16)
    # bias + RMSNorm gain packed into one resident (2, Cout) f32 input.
    bg = jnp.stack([conv_b.astype(jnp.float32).reshape(Cout),
                    g.astype(jnp.float32).reshape(Cout)], axis=0)

    in_specs = [
        pl.BlockSpec((1, 1, row_tile + 2, Wp, 3 * Cin),
                     lambda b, r: (b, r, 0, 0, 0)),
        pl.BlockSpec((3, 3 * Cin, Cout), lambda b, r: (0, 0, 0)),    # resident
        pl.BlockSpec((2, Cout), lambda b, r: (0, 0)),                # resident
    ]
    args = [x_tiles, w_fold, bg]
    if has_film:
        scale, shift = scale_shift
        film = jnp.stack([scale.astype(jnp.float32).reshape(B, Cout),
                          shift.astype(jnp.float32).reshape(B, Cout)], axis=1)
        in_specs.append(pl.BlockSpec((1, 2, Cout), lambda b, r: (b, 0, 0)))
        args.append(film)

    out = pl.pallas_call(
        functools.partial(_block_kernel, has_film=has_film),
        out_shape=jax.ShapeDtypeStruct((B, Hp, Wp, Cout), jnp.float32),
        grid=(B, nR),
        in_specs=in_specs,
        out_specs=pl.BlockSpec((1, row_tile, Wp, Cout), lambda b, r: (b, r, 0, 0)),
        compiler_params=pltpu.CompilerParams(
            dimension_semantics=("parallel", "parallel"),
            vmem_limit_bytes=32 * 1024 * 1024),
    )(*args)

    # TODO(synk): for very small Cout (<128) the store path is still lane-masked;
    # folding W into lanes would require an in-kernel relayout, so it is left as-is.
    return jnp.transpose(out[:, :H, :W, :], (0, 3, 1, 2))


def _reference(x, conv_w, conv_b, g, scale_shift=None):
    """Pure-JAX f32 reference matching the PyTorch Block.forward."""
    B, Cin, H, W = x.shape
    Cout = conv_w.shape[0]
    xf = x.astype(jnp.float32)
    xp = jnp.pad(xf, ((0, 0), (0, 0), (1, 1), (1, 1)))
    y = jnp.zeros((B, Cout, H, W), jnp.float32)
    for ky in range(3):
        for kx in range(3):
            win = xp[:, :, ky:ky + H, kx:kx + W]
            y = y + jnp.einsum("bihw,oi->bohw", win,
                               conv_w[:, :, ky, kx].astype(jnp.float32),
                               precision=jax.lax.Precision.HIGHEST)
    y = y + conv_b.astype(jnp.float32)[None, :, None, None]
    norm = jnp.sqrt(jnp.sum(y * y, axis=1, keepdims=True))
    y = y / jnp.maximum(norm, 1e-12) * g.reshape(1, Cout, 1, 1) * (Cout ** 0.5)
    if scale_shift is not None:
        scale, shift = scale_shift
        y = (y * (scale.reshape(B, Cout, 1, 1) + 1.0)
             + shift.reshape(B, Cout, 1, 1))
    return y * jax.nn.sigmoid(y)


if __name__ == "__main__":
    key = jax.random.PRNGKey(0)
    k_x, k_w, k_b, k_g, k_s1, k_s2, k_x2, k_w2, k_b2 = jax.random.split(key, 9)
    B, Cin, Cout, H, W = 2, 4, 8, 16, 16

    x = jax.random.normal(k_x, (B, Cin, H, W), jnp.float32)
    conv_w = 0.2 * jax.random.normal(k_w, (Cout, Cin, 3, 3), jnp.float32)
    conv_b = 0.1 * jax.random.normal(k_b, (Cout,), jnp.float32)
    g = 1.0 + 0.1 * jax.random.normal(k_g, (1, Cout, 1, 1), jnp.float32)
    scale = 0.1 * jax.random.normal(k_s1, (B, Cout, 1, 1), jnp.float32)
    shift = 0.1 * jax.random.normal(k_s2, (B, Cout, 1, 1), jnp.float32)

    TOL = 2e-2  # bf16 MXU operands (f32 accumulation) + approx reciprocal

    # Multi-row-tile path (grid = (B, 2)).
    out_plain = jax.block_until_ready(
        block_forward(x, conv_w, conv_b, g, row_tile=8))
    out_film = jax.block_until_ready(
        block_forward(x, conv_w, conv_b, g, (scale, shift), row_tile=8))
    # Default (single-tile) path.
    out_plain_def = jax.block_until_ready(block_forward(x, conv_w, conv_b, g))

    ref_plain = _reference(x, conv_w, conv_b, g)
    ref_film = _reference(x, conv_w, conv_b, g, (scale, shift))

    assert out_plain.shape == (B, Cout, H, W), out_plain.shape
    assert out_plain.dtype == jnp.float32, out_plain.dtype
    assert jnp.allclose(out_plain, ref_plain, atol=TOL, rtol=TOL), \
        float(jnp.max(jnp.abs(out_plain - ref_plain)))
    assert jnp.allclose(out_plain_def, ref_plain, atol=TOL, rtol=TOL), \
        float(jnp.max(jnp.abs(out_plain_def - ref_plain)))
    assert jnp.allclose(out_film, ref_film, atol=TOL, rtol=TOL), \
        float(jnp.max(jnp.abs(out_film - ref_film)))

    # Ragged shapes (H not multiple of row_tile, W not multiple of 8) exercise the
    # padding/slicing glue.
    B2, Cin2, Cout2, H2, W2 = 1, 3, 8, 10, 12
    x2 = jax.random.normal(k_x2, (B2, Cin2, H2, W2), jnp.float32)
    conv_w2 = 0.2 * jax.random.normal(k_w2, (Cout2, Cin2, 3, 3), jnp.float32)
    conv_b2 = 0.1 * jax.random.normal(k_b2, (Cout2,), jnp.float32)
    g2 = jnp.ones((1, Cout2, 1, 1), jnp.float32)
    out2 = jax.block_until_ready(
        block_forward(x2, conv_w2, conv_b2, g2, row_tile=4))
    ref2 = _reference(x2, conv_w2, conv_b2, g2)
    assert out2.shape == (B2, Cout2, H2, W2), out2.shape
    assert jnp.allclose(out2, ref2, atol=TOL, rtol=TOL), \
        float(jnp.max(jnp.abs(out2 - ref2)))

    print("KERNEL_OK")
</pallas_src>

<mosaic_0001>
module attributes {stable_mosaic.version = 11 : i64} {
  func.func @_block_kernel(%arg0: i32, %arg1: i32, %arg2: memref<1x1x10x16x12xbf16, #tpu.memory_space<vmem>>, %arg3: memref<3x12x8xbf16, #tpu.memory_space<vmem>>, %arg4: memref<2x8xf32, #tpu.memory_space<vmem>>, %arg5: memref<1x8x16x8xf32, #tpu.memory_space<vmem>>) attributes {dimension_semantics = [#tpu.dimension_semantics<parallel>, #tpu.dimension_semantics<parallel>], iteration_bounds = array<i64: 2, 2>, scalar_prefetch = 0 : i64, scratch_operands = 0 : i64, tpu.core_type = #tpu.core_type<tc>, window_params = [{transform_indices = @transform_0, window_bounds = array<i64: 1, 1, 10, 16, 12>}, {pipeline_mode = #tpu.pipeline_mode<synchronous>, transform_indices = @transform_1, window_bounds = array<i64: 3, 12, 8>}, {pipeline_mode = #tpu.pipeline_mode<synchronous>, transform_indices = @transform_2, window_bounds = array<i64: 2, 8>}, {transform_indices = @transform_3, window_bounds = array<i64: 1, 8, 16, 8>}]} {
    %cst = arith.constant 0.000000e+00 : f32
    %0 = vector.broadcast %cst : f32 to vector<128x8xf32>
    %c0 = arith.constant 0 : index
    %c0_0 = arith.constant 0 : index
    %c0_1 = arith.constant 0 : index
    %c0_2 = arith.constant 0 : index
    %c0_3 = arith.constant 0 : index
    %1 = vector.load %arg2[%c0, %c0_0, %c0_1, %c0_2, %c0_3] : memref<1x1x10x16x12xbf16, #tpu.memory_space<vmem>>, vector<1x1x8x16x12xbf16>
    %2 = vector.shape_cast %1 : vector<1x1x8x16x12xbf16> to vector<8x16x12xbf16>
    %3 = vector.shape_cast %2 : vector<8x16x12xbf16> to vector<128x12xbf16>
    %c0_4 = arith.constant 0 : index
    %c0_5 = arith.constant 0 : index
    %c0_6 = arith.constant 0 : index
    %4 = vector.load %arg3[%c0_4, %c0_5, %c0_6] : memref<3x12x8xbf16, #tpu.memory_space<vmem>>, vector<1x12x8xbf16>
    %5 = vector.shape_cast %4 : vector<1x12x8xbf16> to vector<12x8xbf16>
    %cst_7 = arith.constant dense<0.000000e+00> : vector<128x8xf32>
    %6 = tpu.matmul %3, %5, %cst_7 {dimension_numbers = #tpu.dot_dimension_numbers<[1], [0], [0], [1], [0, 0, 1, 1], [], []>} : vector<128x12xbf16>, vector<12x8xbf16>, vector<128x8xf32> -> vector<128x8xf32>
    %7 = arith.addf %0, %6 : vector<128x8xf32>
    %c0_8 = arith.constant 0 : index
    %c0_9 = arith.constant 0 : index
    %c1 = arith.constant 1 : index
    %c0_10 = arith.constant 0 : index
    %c0_11 = arith.constant 0 : index
    %8 = vector.load %arg2[%c0_8, %c0_9, %c1, %c0_10, %c0_11] : memref<1x1x10x16x12xbf16, #tpu.memory_space<vmem>>, vector<1x1x8x16x12xbf16>
    %9 = vector.shape_cast %8 : vector<1x1x8x16x12xbf16> to vector<8x16x12xbf16>
    %10 = vector.shape_cast %9 : vector<8x16x12xbf16> to vector<128x12xbf16>
    %c1_12 = arith.constant 1 : index
    %c0_13 = arith.constant 0 : index
    %c0_14 = arith.constant 0 : index
    %11 = vector.load %arg3[%c1_12, %c0_13, %c0_14] : memref<3x12x8xbf16, #tpu.memory_space<vmem>>, vector<1x12x8xbf16>
    %12 = vector.shape_cast %11 : vector<1x12x8xbf16> to vector<12x8xbf16>
    %cst_15 = arith.constant dense<0.000000e+00> : vector<128x8xf32>
    %13 = tpu.matmul %10, %12, %cst_15 {dimension_numbers = #tpu.dot_dimension_numbers<[1], [0], [0], [1], [0, 0, 1, 1], [], []>} : vector<128x12xbf16>, vector<12x8xbf16>, vector<128x8xf32> -> vector<128x8xf32>
    %14 = arith.addf %7, %13 : vector<128x8xf32>
    %c0_16 = arith.constant 0 : index
    %c0_17 = arith.constant 0 : index
    %c2 = arith.constant 2 : index
    %c0_18 = arith.constant 0 : index
    %c0_19 = arith.constant 0 : index
    %15 = vector.load %arg2[%c0_16, %c0_17, %c2, %c0_18, %c0_19] : memref<1x1x10x16x12xbf16, #tpu.memory_space<vmem>>, vector<1x1x8x16x12xbf16>
    %16 = vector.shape_cast %15 : vector<1x1x8x16x12xbf16> to vector<8x16x12xbf16>
    %17 = vector.shape_cast %16 : vector<8x16x12xbf16> to vector<128x12xbf16>
    %c2_20 = arith.constant 2 : index
    %c0_21 = arith.constant 0 : index
    %c0_22 = arith.constant 0 : index
    %18 = vector.load %arg3[%c2_20, %c0_21, %c0_22] : memref<3x12x8xbf16, #tpu.memory_space<vmem>>, vector<1x12x8xbf16>
    %19 = vector.shape_cast %18 : vector<1x12x8xbf16> to vector<12x8xbf16>
    %cst_23 = arith.constant dense<0.000000e+00> : vector<128x8xf32>
    %20 = tpu.matmul %17, %19, %cst_23 {dimension_numbers = #tpu.dot_dimension_numbers<[1], [0], [0], [1], [0, 0, 1, 1], [], []>} : vector<128x12xbf16>, vector<12x8xbf16>, vector<128x8xf32> -> vector<128x8xf32>
    %21 = arith.addf %14, %20 : vector<128x8xf32>
    %c0_24 = arith.constant 0 : index
    %c0_25 = arith.constant 0 : index
    %22 = vector.load %arg4[%c0_24, %c0_25] : memref<2x8xf32, #tpu.memory_space<vmem>>, vector<1x8xf32>
    %23 = vector.broadcast %22 : vector<1x8xf32> to vector<128x8xf32>
    %24 = arith.addf %21, %23 : vector<128x8xf32>
    %25 = arith.mulf %24, %24 : vector<128x8xf32>
    %cst_26 = arith.constant dense<0.000000e+00> : vector<128xf32>
    %26 = vector.multi_reduction <add>, %25, %cst_26 [1] : vector<128x8xf32> to vector<128xf32>
    %27 = vector.shape_cast %26 : vector<128xf32> to vector<128x1xf32>
    %cst_27 = arith.constant 1.000000e-24 : f32
    %28 = vector.broadcast %cst_27 : f32 to vector<128x1xf32>
    %29 = arith.maximumf %27, %28 : vector<128x1xf32>
    %30 = math.rsqrt %29 : vector<128x1xf32>
    %31 = vector.broadcast %30 : vector<128x1xf32> to vector<128x8xf32>
    %32 = arith.mulf %24, %31 : vector<128x8xf32>
    %c1_28 = arith.constant 1 : index
    %c0_29 = arith.constant 0 : index
    %33 = vector.load %arg4[%c1_28, %c0_29] : memref<2x8xf32, #tpu.memory_space<vmem>>, vector<1x8xf32>
    %cst_30 = arith.constant 2.82842708 : f32
    %34 = vector.broadcast %cst_30 : f32 to vector<1x8xf32>
    %35 = arith.mulf %33, %34 : vector<1x8xf32>
    %36 = vector.broadcast %35 : vector<1x8xf32> to vector<128x8xf32>
    %37 = arith.mulf %32, %36 : vector<128x8xf32>
    %cst_31 = arith.constant 0.000000e+00 : f32
    %38 = vector.broadcast %cst_31 : f32 to vector<128x8xf32>
    %39 = arith.subf %38, %37 : vector<128x8xf32>
    %40 = math.exp %39 : vector<128x8xf32>
    %cst_32 = arith.constant 1.000000e+00 : f32
    %41 = vector.broadcast %cst_32 : f32 to vector<128x8xf32>
    %42 = arith.addf %41, %40 : vector<128x8xf32>
    %43 = tpu.reciprocal %42 {approx = true} : vector<128x8xf32> -> vector<128x8xf32>
    %44 = arith.mulf %37, %43 : vector<128x8xf32>
    %45 = vector.shape_cast %44 : vector<128x8xf32> to vector<1x8x16x8xf32>
    %c0_33 = arith.constant 0 : index
    %c0_34 = arith.constant 0 : index
    %c0_35 = arith.constant 0 : index
    %c0_36 = arith.constant 0 : index
    %46 = vector.load %arg5[%c0_33, %c0_34, %c0_35, %c0_36] : memref<1x8x16x8xf32, #tpu.memory_space<vmem>>, vector<1x8x16x8xf32>
    tpu.vector_store %arg5[%c0_33, %c0_34, %c0_35, %c0_36], %45 {strides = array<i32>} : memref<1x8x16x8xf32, #tpu.memory_space<vmem>>, vector<1x8x16x8xf32>,
    return
  }
  func.func @transform_0(%arg0: i32, %arg1: i32) -> (i32, i32, i32, i32, i32) {
    %c0_i32 = arith.constant 0 : i32
    %c0_i32_0 = arith.constant 0 : i32
    %c0_i32_1 = arith.constant 0 : i32
    %c0_i32_2 = arith.constant 0 : i32
    return %arg0, %arg1, %c0_i32, %c0_i32_0, %c0_i32_1 : i32, i32, i32, i32, i32
  }
  func.func @transform_1(%arg0: i32, %arg1: i32) -> (i32, i32, i32) {
    %c0_i32 = arith.constant 0 : i32
    %c0_i32_0 = arith.constant 0 : i32
    %c0_i32_1 = arith.constant 0 : i32
    %c0_i32_2 = arith.constant 0 : i32
    return %c0_i32, %c0_i32_0, %c0_i32_1 : i32, i32, i32
  }
  func.func @transform_2(%arg0: i32, %arg1: i32) -> (i32, i32) {
    %c0_i32 = arith.constant 0 : i32
    %c0_i32_0 = arith.constant 0 : i32
    %c0_i32_1 = arith.constant 0 : i32
    return %c0_i32, %c0_i32_0 : i32, i32
  }
  func.func @transform_3(%arg0: i32, %arg1: i32) -> (i32, i32, i32, i32) {
    %c0_i32 = arith.constant 0 : i32
    %c0_i32_0 = arith.constant 0 : i32
    %c0_i32_1 = arith.constant 0 : i32
    return %arg0, %arg1, %c0_i32, %c0_i32_0 : i32, i32, i32, i32
  }
}

</mosaic_0001>

<llo_original>
// kernel: tpu_custom_call.1
$region0: #{tpu_custom_call.1}
  #allocation0 [shape = 'u32[]', space=smem, size = 0x4, offset = 0x4, fixed_abs, tag = 'smem constant byte address 0x4 - core index']
  #allocation1 [shape = 'u32[144,128]{1,0:T(1,128)}', space=vmem, size = 0x12000, scoped, tag = 'internal scratch']
  %s0 = inlined_call_operand.vmem [shape: bf16[2,2,10,16,12], index: 0, kind: input, shape index: {}]
  %s1 = inlined_call_operand.vmem [shape: bf16[3,12,8], index: 1, kind: input, shape index: {}]
  %s2 = inlined_call_operand.vmem [shape: f32[2,8], index: 2, kind: input, shape index: {}]
  %s3 = inlined_call_operand.vmem [shape: f32[2,16,16,8], index: 3, kind: output, shape index: {}]
  %s4 = sld [smem:[#allocation0]]
  $region45: #{tpu_custom_call.1} parent=0
    _
  %s6 = ssub.s32 1, %s4
  %s7 = scalar_select 0, %s6, %s4
  loop: start=0, step=1, limit=6
  $region2: #{tpu_custom_call.1} parent=0 // loop_pre_header
    _
  $region3: #{tpu_custom_call.1} parent=0 // loop_header
    %s9 = sphi 0, %s13
    %p10 = scmp.ge.s32.totalorder %s9, 6
    %s16 = sphi 0, %s28
    %s17 = sphi 0, %s24
    %s18 = sphi 0, %s16
    %s19 = sphi 0, %s17
    %s20 = sphi 0, %s18
    %s21 = sphi 0, %s19
    %s33 = sphi 0, %s35
    %s36 = sphi 0, %s33
    %s37 = sphi 0, %s36
    %s53 = sphi 0, %s37
    %s57 = sphi 0, %s57
    %s59 = sphi 0, %s57
    %s60 = sphi 0, %s59
    %s74 = sphi 0, %s60
    %s78 = sphi 0, %s78
    %s80 = sphi 0, %s78
    %s81 = sphi 0, %s80
    %s95 = sphi 0, %s81
    %s103 = sphi 0, %s105
    %s106 = sphi 0, %s103
    %s107 = sphi 0, %s106
    %s123 = sphi 0, %s107
  $region4: #{tpu_custom_call.1} parent=0 // loop_header_branch
    %12 = sbr.rel (%p10) target = $region8
  $region5: #{tpu_custom_call.1} parent=0 // loop_body
    %s14 = ssub.s32 %s9, 1
    %s15 = ssub.s32 %s9, 2
    %s22 = sadd.s32 1, %s17
    %p23 = scmp.ge.s32.totalorder %s22, 2
    %s24 = scalar_select %p23, 0, %s22
    %s25 = sadd.s32 1, %s16
    %s26 = scalar_select %p23, %s25, %s16
    %p27 = scmp.ge.s32.totalorder %s26, 2
    %s28 = scalar_select %p27, 0, %s26
    %s29 = ssub.s32 %s16, %s28
    %s30 = ssub.s32 %s17, %s24
    %s31 = sor.u32 %s29, %s30
    %p32 = scmp.eq.s32.totalorder %s31, 0
    %s34 = sadd.s32 %s33, 1
    %s35 = scalar_select %p32, %s33, %s34
    %p38 = pneg %p32
    %p39 = scmp.eq.s32.totalorder %s9, 3
    %p40 = por %p38, %p39
    %p41 = scmp.ne.s32.totalorder %s33, %s36
    %p42 = scmp.eq.s32.totalorder %s9, 0
    %p43 = por %p41, %p42
    %p44 = scmp.ne.s32.totalorder %s33, %s36
    %p45 = scmp.eq.s32.totalorder %s14, 3
    %p46 = por %p44, %p45
    %p47 = scmp.ne.s32.totalorder %s36, %s37
    %p48 = scmp.eq.s32.totalorder %s14, 0
    %p49 = por %p47, %p48
    %p50 = scmp.ne.s32.totalorder %s36, %s37
    %p51 = scmp.eq.s32.totalorder %s15, 3
    %p52 = por %p50, %p51
    %p54 = scmp.ne.s32.totalorder %s37, %s53
    %p55 = scmp.eq.s32.totalorder %s15, 0
    %p56 = por %p54, %p55
    %s58 = sadd.s32 %s57, 1
    %p61 = scmp.eq.s32.totalorder %s9, 3
    %p62 = scmp.ne.s32.totalorder %s57, %s59
    %p63 = scmp.eq.s32.totalorder %s9, 0
    %p64 = por %p62, %p63
    %p65 = scmp.ne.s32.totalorder %s57, %s59
    %p66 = scmp.eq.s32.totalorder %s14, 3
    %p67 = por %p65, %p66
    %p68 = scmp.ne.s32.totalorder %s59, %s60
    %p69 = scmp.eq.s32.totalorder %s14, 0
    %p70 = por %p68, %p69
    %p71 = scmp.ne.s32.totalorder %s59, %s60
    %p72 = scmp.eq.s32.totalorder %s15, 3
    %p73 = por %p71, %p72
    %p75 = scmp.ne.s32.totalorder %s60, %s74
    %p76 = scmp.eq.s32.totalorder %s15, 0
    %p77 = por %p75, %p76
    %s79 = sadd.s32 %s78, 1
    %p82 = scmp.eq.s32.totalorder %s9, 3
    %p83 = scmp.ne.s32.totalorder %s78, %s80
    %p84 = scmp.eq.s32.totalorder %s9, 0
    %p85 = por %p83, %p84
    %p86 = scmp.ne.s32.totalorder %s78, %s80
    %p87 = scmp.eq.s32.totalorder %s14, 3
    %p88 = por %p86, %p87
    %p89 = scmp.ne.s32.totalorder %s80, %s81
    %p90 = scmp.eq.s32.totalorder %s14, 0
    %p91 = por %p89, %p90
    %p92 = scmp.ne.s32.totalorder %s80, %s81
    %p93 = scmp.eq.s32.totalorder %s15, 3
    %p94 = por %p92, %p93
    %p96 = scmp.ne.s32.totalorder %s81, %s95
    %p97 = scmp.eq.s32.totalorder %s15, 0
    %p98 = por %p96, %p97
    %s99 = ssub.s32 %s16, %s28
    %s100 = ssub.s32 %s17, %s24
    %s101 = sor.u32 %s99, %s100
    %p102 = scmp.eq.s32.totalorder %s101, 0
    %s104 = sadd.s32 %s103, 1
    %s105 = scalar_select %p102, %s103, %s104
    %p108 = pneg %p102
    %p109 = scmp.eq.s32.totalorder %s9, 3
    %p110 = por %p108, %p109
    %p111 = scmp.ne.s32.totalorder %s103, %s106
    %p112 = scmp.eq.s32.totalorder %s9, 0
    %p113 = por %p111, %p112
    %p114 = scmp.ne.s32.totalorder %s103, %s106
    %p115 = scmp.eq.s32.totalorder %s14, 3
    %p116 = por %p114, %p115
    %p117 = scmp.ne.s32.totalorder %s106, %s107
    %p118 = scmp.eq.s32.totalorder %s14, 0
    %p119 = por %p117, %p118
    %p120 = scmp.ne.s32.totalorder %s106, %s107
    %p121 = scmp.eq.s32.totalorder %s15, 3
    %p122 = por %p120, %p121
    %p124 = scmp.ne.s32.totalorder %s107, %s123
    %p125 = scmp.eq.s32.totalorder %s15, 0
    %p126 = por %p124, %p125
    %p127 = scmp.le.s32.totalorder 1, %s9
    %p128 = scmp.lt.s32.totalorder %s9, 5
    %p129 = pnand %p127, %p128
    %p130 = pneg %p129
    // Predicated region
    $region9: #{tpu_custom_call.1} parent=5 // pred_check
      _
    $region10: #{tpu_custom_call.1} parent=5 // pred_check_branch
      %132 = sbr.rel (%p129) target = $region12
    $region11: #{tpu_custom_call.1} parent=5 // pred_region
      %s133 = ssub.s32 %s9, 1
      // Predicated region
      $region13: #{tpu_custom_call.1} parent=11 // pred_check
        %p134 = pneg %p70
      $region14: #{tpu_custom_call.1} parent=11 // pred_check_branch
        %136 = sbr.rel (%p134) target = $region16
      $region15: #{tpu_custom_call.1} parent=11 // pred_region
        _
      $region16: #{tpu_custom_call.1} parent=11 // pred_fallthru
        _
      // Predicated region
      $region17: #{tpu_custom_call.1} parent=11 // pred_check
        %p137 = pneg %p91
      $region18: #{tpu_custom_call.1} parent=11 // pred_check_branch
        %139 = sbr.rel (%p137) target = $region20
      $region19: #{tpu_custom_call.1} parent=11 // pred_region
        _
      $region20: #{tpu_custom_call.1} parent=11 // pred_fallthru
        _
    $region12: #{tpu_custom_call.1} parent=5 // pred_fallthru
      _
    %p140 = scmp.lt.s32.totalorder %s9, 4
    // Predicated region
    $region21: #{tpu_custom_call.1} parent=5 // pred_check
      %p141 = pneg %p140
    $region22: #{tpu_custom_call.1} parent=5 // pred_check_branch
      %143 = sbr.rel (%p141) target = $region24
    $region23: #{tpu_custom_call.1} parent=5 // pred_region
      // Predicated region
      $region25: #{tpu_custom_call.1} parent=23 // pred_check
        %p144 = pneg %p43
      $region26: #{tpu_custom_call.1} parent=23 // pred_check_branch
        %146 = sbr.rel (%p144) target = $region28
      $region27: #{tpu_custom_call.1} parent=23 // pred_region
        %p147 = scmp.lt.s32.totalorder %s16, 1
        %s148 = scalar_select %p147, %s16, 1
        %p149 = scmp.lt.s32.totalorder %s17, 1
        %s150 = scalar_select %p149, %s17, 1
        %s151 = smul.addr %s150, 20
        %s152 = smul.addr %s148, 40
        %s153 = sadd.s32 %s151, %s152
        %s154 = smul.addr %s153, 4
        %s155 = scalar_lea.vmem %s0, %s154
      $region28: #{tpu_custom_call.1} parent=23 // pred_fallthru
        _
    $region24: #{tpu_custom_call.1} parent=5 // pred_fallthru
      _
    %p156 = scmp.le.s32.totalorder 1, %s9
    %p157 = scmp.lt.s32.totalorder %s9, 5
    %p158 = pnand %p156, %p157
    %p159 = pneg %p158
    // Predicated region
    $region29: #{tpu_custom_call.1} parent=5 // pred_check
      _
    $region30: #{tpu_custom_call.1} parent=5 // pred_check_branch
      %161 = sbr.rel (%p158) target = $region32
    $region31: #{tpu_custom_call.1} parent=5 // pred_region
      %s162 = ssub.s32 %s9, 1
      %p163 = scmp.lt.s32.totalorder %s18, 1
      %s164 = scalar_select %p163, %s18, 1
      %p165 = scmp.lt.s32.totalorder %s19, 1
      %s166 = scalar_select %p165, %s19, 1
      %s167 = smul.addr %s166, 20
      %s168 = smul.addr %s164, 40
      %s169 = sadd.s32 %s167, %s168
      %s170 = smul.addr %s169, 4
      %s171 = scalar_lea.vmem %s0, %s170
      %p172 = pneg %p49
      %p173 = pneg %p46
      %p174 = pneg %p70
      %p175 = pneg %p67
      %p176 = pneg %p91
      %p177 = pneg %p88
      %p178 = pneg %p119
      %p179 = pneg %p116
      %s180 = smul.u32 8, %s19
      %p181 = scmp.lt.s32.totalorder %s18, 1
      %s182 = scalar_select %p181, %s18, 1
      %p183 = scmp.lt.s32.totalorder %s180, 15
      %s184 = scalar_select %p183, %s180, 15
      %s185 = smul.addr %s184, 2
      %s186 = smul.addr %s182, 32
      %s187 = sadd.s32 %s185, %s186
      %s188 = smul.addr %s187, 8
      %s189 = scalar_lea.vmem %s3, %s188
      %p190 = scmp.lt.s32.totalorder %s18, 1
      %s191 = scalar_select %p190, %s18, 1
      %p192 = scmp.lt.s32.totalorder %s19, 1
      %s193 = scalar_select %p192, %s19, 1
      %s194 = smul.addr %s193, 20
      %s195 = smul.addr %s191, 40
      %s196 = sadd.s32 %s194, %s195
      %s197 = smul.addr %s196, 4
      %s198 = scalar_lea.vmem %s0, %s197
      %s199 = smul.u32 8, %s19
      %p200 = scmp.lt.s32.totalorder %s18, 1
      %s201 = scalar_select %p200, %s18, 1
      %p202 = scmp.lt.s32.totalorder %s199, 15
      %s203 = scalar_select %p202, %s199, 15
      %s204 = smul.addr %s203, 2
      %s205 = smul.addr %s201, 32
      %s206 = sadd.s32 %s204, %s205
      %s207 = smul.addr %s206, 8
      %s208 = scalar_lea.vmem %s3, %s207
      %s209 = smul.u32 8, %s19
      %v211 = vld [vmem:[%s198] sm:$0xf]
      %v212 = vld [vmem:[%s198 + $0x4] sm:$0xf]
      %v213 = vld [vmem:[%s198 + $0x8] sm:$0xf]
      %v214 = vld [vmem:[%s198 + $0xc] sm:$0xf]
      %v215 = vld [vmem:[%s198 + $0x10] sm:$0xf]
      %v216 = vld [vmem:[%s198 + $0x14] sm:$0xf]
      %v217 = vld [vmem:[%s198 + $0x18] sm:$0xf]
      %v218 = vld [vmem:[%s198 + $0x1c] sm:$0xf]
      %v219 = vld [vmem:[%s198 + $0x20] sm:$0xf]
      %v220 = vld [vmem:[%s198 + $0x24] sm:$0xf]
      %v221 = vld [vmem:[%s198 + $0x28] sm:$0xf]
      %v222 = vld [vmem:[%s198 + $0x2c] sm:$0xf]
      %v223 = vld [vmem:[%s198 + $0x30] sm:$0xf]
      %v224 = vld [vmem:[%s198 + $0x34] sm:$0xf]
      %v225 = vld [vmem:[%s198 + $0x38] sm:$0xf]
      %v226 = vld [vmem:[%s198 + $0x3c] sm:$0xf]
      %v227 = vld [vmem:[%s1] sm:$0xf]
      %v228 = vld [vmem:[%s1 + $0x4] sm:$0x3]
      %s229 = scalar_lea.vmem %s198, 8
      %v230 = vld [vmem:[%s229] sm:$0xf]
      %v231 = vld [vmem:[%s229 + $0x4] sm:$0xf]
      %v232 = vld [vmem:[%s229 + $0x8] sm:$0xf]
      %v233 = vld [vmem:[%s229 + $0xc] sm:$0xf]
      %v234 = vld [vmem:[%s229 + $0x10] sm:$0xf]
      %v235 = vld [vmem:[%s229 + $0x14] sm:$0xf]
      %v236 = vld [vmem:[%s229 + $0x18] sm:$0xf]
      %v237 = vld [vmem:[%s229 + $0x1c] sm:$0xf]
      %v238 = vld [vmem:[%s229 + $0x20] sm:$0xf]
      %v239 = vld [vmem:[%s229 + $0x24] sm:$0xf]
      %v240 = vld [vmem:[%s229 + $0x28] sm:$0xf]
      %v241 = vld [vmem:[%s229 + $0x2c] sm:$0xf]
      %v242 = vld [vmem:[%s229 + $0x30] sm:$0xf]
      %v243 = vld [vmem:[%s229 + $0x34] sm:$0xf]
      %v244 = vld [vmem:[%s229 + $0x38] sm:$0xf]
      %v245 = vld [vmem:[%s229 + $0x3c] sm:$0xf]
      %s246 = scalar_lea.vmem %s1, 8
      %v247 = vld [vmem:[%s246] sm:$0xf]
      %v248 = vld [vmem:[%s246 + $0x4] sm:$0x3]
      %v265 = vunpack.c.l.b16 %v230
      %v266 = vunpack.c.l.b16 %v231
      %v267 = vunpack.c.l.b16 %v232
      %v268 = vunpack.c.l.b16 %v233
      %v269 = vunpack.c.l.b16 %v234
      %v270 = vunpack.c.l.b16 %v235
      %v271 = vunpack.c.l.b16 %v236
      %v272 = vunpack.c.l.b16 %v237
      %v273 = vunpack.c.l.b16 %v238
      %v274 = vunpack.c.l.b16 %v239
      %v275 = vunpack.c.l.b16 %v240
      %v276 = vunpack.c.l.b16 %v241
      %v277 = vunpack.c.l.b16 %v242
      %v278 = vunpack.c.l.b16 %v243
      %v279 = vunpack.c.l.b16 %v244
      %v280 = vunpack.c.l.b16 %v245
      %v281 = vpack.c.b16 %v266, %v265
      %v282 = vpack.c.b16 %v268, %v267
      %v283 = vpack.c.b16 %v270, %v269
      %v284 = vpack.c.b16 %v272, %v271
      %v285 = vpack.c.b16 %v274, %v273
      %v286 = vpack.c.b16 %v276, %v275
      %v287 = vpack.c.b16 %v278, %v277
      %v288 = vpack.c.b16 %v280, %v279
      %v291 = vunpack.c.l.b16 %v247
      %v292 = vunpack.c.l.b16 %v248
      %v293 = vpack.c.b16 %v292, %v291
      %vm294 = vcmask 97280
      %v296 = vsel %vm294, %v281, 0
      %v299 = vsel %vm294, %v282, 0
      %v302 = vsel %vm294, %v283, 0
      %v305 = vsel %vm294, %v284, 0
      %v308 = vsel %vm294, %v285, 0
      %v311 = vsel %vm294, %v286, 0
      %v314 = vsel %vm294, %v287, 0
      %v317 = vsel %vm294, %v288, 0
      %vm319 = vcmask 1045504
      %v321 = vsel %vm319, %v293, 0
      %323 = vmatprep.subr.bf16.mxu0 0
      %324 = vmatpush1.bf16.msra.mxu0 0
      %325 = vmatprep.subr.bf16.mxu0 0
      %326 = vmatpush1.bf16.msra.mxu0 0
      %327 = vmatprep.subr.bf16.mxu0 0
      %328 = vmatpush1.bf16.msra.mxu0 0
      %329 = vmatprep.subr.bf16.mxu0 0
      %330 = vmatpush1.bf16.msra.mxu0 0
      %331 = vmatprep.subr.bf16.mxu0 0
      %332 = vmatpush1.bf16.msra.mxu0 0
      %333 = vmatprep.subr.bf16.mxu0 0
      %334 = vmatpush1.bf16.msra.mxu0 0
      %335 = vmatprep.subr.bf16.mxu0 0
      %336 = vmatpush1.bf16.msra.mxu0 0
      %337 = vmatprep.subr.bf16.mxu0 0
      %338 = vmatpush1.bf16.msra.mxu0 %v321
      %339 = vmatprep.subr.bf16.mxu0 0
      %340 = vmatpush2.bf16.msra.mxu0 0
      %341 = vmatprep.subr.bf16.mxu0 0
      %342 = vmatpush2.bf16.msra.mxu0 0
      %343 = vmatprep.subr.bf16.mxu0 0
      %344 = vmatpush2.bf16.msra.mxu0 0
      %345 = vmatprep.subr.bf16.mxu0 0
      %346 = vmatpush2.bf16.msra.mxu0 0
      %347 = vmatprep.subr.bf16.mxu0 0
      %348 = vmatpush2.bf16.msra.mxu0 0
      %349 = vmatprep.subr.bf16.mxu0 0
      %350 = vmatpush2.bf16.msra.mxu0 0
      %351 = vmatprep.subr.bf16.mxu0 0
      %352 = vmatpush2.bf16.msra.mxu0 0
      %353 = vmatprep.subr.bf16.mxu0 0
      %354 = vmatpush2.bf16.msra.mxu0 0
      %355 = vmatprep.mubr.bf16.mxu0 0
      %356 = vmatmul.mubr.bf16.gmra.mxu0 %v296
      %v357 = vpop.f32.mrf.mxu0
      %v358 = vadd.f32 0.0, %v357
      %v359 = vpop.f32.mrf.mxu0
      %v360 = vpop.f32.mrf.mxu0
      %v361 = vadd.f32 0.0, %v360
      %v362 = vpop.f32.mrf.mxu0
      %363 = vmatprep.mubr.bf16.mxu0 0
      %364 = vmatmul.mubr.bf16.gmra.mxu0 %v299
      %v365 = vpop.f32.mrf.mxu0
      %v366 = vadd.f32 0.0, %v365
      %v367 = vpop.f32.mrf.mxu0
      %v368 = vpop.f32.mrf.mxu0
      %v369 = vadd.f32 0.0, %v368
      %v370 = vpop.f32.mrf.mxu0
      %371 = vmatprep.mubr.bf16.mxu0 0
      %372 = vmatmul.mubr.bf16.gmra.mxu0 %v302
      %v373 = vpop.f32.mrf.mxu0
      %v374 = vadd.f32 0.0, %v373
      %v375 = vpop.f32.mrf.mxu0
      %v376 = vpop.f32.mrf.mxu0
      %v377 = vadd.f32 0.0, %v376
      %v378 = vpop.f32.mrf.mxu0
      %379 = vmatprep.mubr.bf16.mxu0 0
      %380 = vmatmul.mubr.bf16.gmra.mxu0 %v305
      %v381 = vpop.f32.mrf.mxu0
      %v382 = vadd.f32 0.0, %v381
      %v383 = vpop.f32.mrf.mxu0
      %v384 = vpop.f32.mrf.mxu0
      %v385 = vadd.f32 0.0, %v384
      %v386 = vpop.f32.mrf.mxu0
      %387 = vmatprep.mubr.bf16.mxu0 0
      %388 = vmatmul.mubr.bf16.gmra.mxu0 %v308
      %v389 = vpop.f32.mrf.mxu0
      %v390 = vadd.f32 0.0, %v389
      %v391 = vpop.f32.mrf.mxu0
      %v392 = vpop.f32.mrf.mxu0
      %v393 = vadd.f32 0.0, %v392
      %v394 = vpop.f32.mrf.mxu0
      %395 = vmatprep.mubr.bf16.mxu0 0
      %396 = vmatmul.mubr.bf16.gmra.mxu0 %v311
      %v397 = vpop.f32.mrf.mxu0
      %v398 = vadd.f32 0.0, %v397
      %v399 = vpop.f32.mrf.mxu0
      %v400 = vpop.f32.mrf.mxu0
      %v401 = vadd.f32 0.0, %v400
      %v402 = vpop.f32.mrf.mxu0
      %403 = vmatprep.mubr.bf16.mxu0 0
      %404 = vmatmul.mubr.bf16.gmra.mxu0 %v314
      %v405 = vpop.f32.mrf.mxu0
      %v406 = vadd.f32 0.0, %v405
      %v407 = vpop.f32.mrf.mxu0
      %v408 = vpop.f32.mrf.mxu0
      %v409 = vadd.f32 0.0, %v408
      %v410 = vpop.f32.mrf.mxu0
      %411 = vmatprep.mubr.bf16.mxu0 0
      %412 = vmatmul.mubr.bf16.gmra.mxu0 %v317
      %v413 = vpop.f32.mrf.mxu0
      %v414 = vadd.f32 0.0, %v413
      %v415 = vpop.f32.mrf.mxu0
      %v416 = vpop.f32.mrf.mxu0
      %v417 = vadd.f32 0.0, %v416
      %v418 = vpop.f32.mrf.mxu0
      %419 = vdwg.mxu0
      %v436 = vunpack.c.l.b16 %v211
      %v437 = vunpack.c.l.b16 %v212
      %v438 = vunpack.c.l.b16 %v213
      %v439 = vunpack.c.l.b16 %v214
      %v440 = vunpack.c.l.b16 %v215
      %v441 = vunpack.c.l.b16 %v216
      %v442 = vunpack.c.l.b16 %v217
      %v443 = vunpack.c.l.b16 %v218
      %v444 = vunpack.c.l.b16 %v219
      %v445 = vunpack.c.l.b16 %v220
      %v446 = vunpack.c.l.b16 %v221
      %v447 = vunpack.c.l.b16 %v222
      %v448 = vunpack.c.l.b16 %v223
      %v449 = vunpack.c.l.b16 %v224
      %v450 = vunpack.c.l.b16 %v225
      %v451 = vunpack.c.l.b16 %v226
      %v452 = vpack.c.b16 %v437, %v436
      %v453 = vpack.c.b16 %v439, %v438
      %v454 = vpack.c.b16 %v441, %v440
      %v455 = vpack.c.b16 %v443, %v442
      %v456 = vpack.c.b16 %v445, %v444
      %v457 = vpack.c.b16 %v447, %v446
      %v458 = vpack.c.b16 %v449, %v448
      %v459 = vpack.c.b16 %v451, %v450
      %v462 = vunpack.c.l.b16 %v227
      %v463 = vunpack.c.l.b16 %v228
      %v464 = vpack.c.b16 %v463, %v462
      %v466 = vsel %vm294, %v452, 0
      %v469 = vsel %vm294, %v453, 0
      %v472 = vsel %vm294, %v454, 0
      %v475 = vsel %vm294, %v455, 0
      %v478 = vsel %vm294, %v456, 0
      %v481 = vsel %vm294, %v457, 0
      %v484 = vsel %vm294, %v458, 0
      %v487 = vsel %vm294, %v459, 0
      %v490 = vsel %vm319, %v464, 0
      %492 = vmatprep.subr.bf16.mxu0 0
      %493 = vmatpush1.bf16.msra.mxu0 0
      %494 = vmatprep.subr.bf16.mxu0 0
      %495 = vmatpush1.bf16.msra.mxu0 0
      %496 = vmatprep.subr.bf16.mxu0 0
      %497 = vmatpush1.bf16.msra.mxu0 0
      %498 = vmatprep.subr.bf16.mxu0 0
      %499 = vmatpush1.bf16.msra.mxu0 0
      %500 = vmatprep.subr.bf16.mxu0 0
      %501 = vmatpush1.bf16.msra.mxu0 0
      %502 = vmatprep.subr.bf16.mxu0 0
      %503 = vmatpush1.bf16.msra.mxu0 0
      %504 = vmatprep.subr.bf16.mxu0 0
      %505 = vmatpush1.bf16.msra.mxu0 0
      %506 = vmatprep.subr.bf16.mxu0 0
      %507 = vmatpush1.bf16.msra.mxu0 %v490
      %508 = vmatprep.subr.bf16.mxu0 0
      %509 = vmatpush2.bf16.msra.mxu0 0
      %510 = vmatprep.subr.bf16.mxu0 0
      %511 = vmatpush2.bf16.msra.mxu0 0
      %512 = vmatprep.subr.bf16.mxu0 0
      %513 = vmatpush2.bf16.msra.mxu0 0
      %514 = vmatprep.subr.bf16.mxu0 0
      %515 = vmatpush2.bf16.msra.mxu0 0
      %516 = vmatprep.subr.bf16.mxu0 0
      %517 = vmatpush2.bf16.msra.mxu0 0
      %518 = vmatprep.subr.bf16.mxu0 0
      %519 = vmatpush2.bf16.msra.mxu0 0
      %520 = vmatprep.subr.bf16.mxu0 0
      %521 = vmatpush2.bf16.msra.mxu0 0
      %522 = vmatprep.subr.bf16.mxu0 0
      %523 = vmatpush2.bf16.msra.mxu0 0
      %524 = vmatprep.mubr.bf16.mxu0 0
      %525 = vmatmul.mubr.bf16.gmra.mxu0 %v466
      %v526 = vpop.f32.mrf.mxu0
      %v527 = vadd.f32 %v358, %v526
      %v528 = vpop.f32.mrf.mxu0
      %v529 = vpop.f32.mrf.mxu0
      %v530 = vadd.f32 %v361, %v529
      %v531 = vpop.f32.mrf.mxu0
      %532 = vmatprep.mubr.bf16.mxu0 0
      %533 = vmatmul.mubr.bf16.gmra.mxu0 %v469
      %v534 = vpop.f32.mrf.mxu0
      %v535 = vadd.f32 %v366, %v534
      %v536 = vpop.f32.mrf.mxu0
      %v537 = vpop.f32.mrf.mxu0
      %v538 = vadd.f32 %v369, %v537
      %v539 = vpop.f32.mrf.mxu0
      %540 = vmatprep.mubr.bf16.mxu0 0
      %541 = vmatmul.mubr.bf16.gmra.mxu0 %v472
      %v542 = vpop.f32.mrf.mxu0
      %v543 = vadd.f32 %v374, %v542
      %v544 = vpop.f32.mrf.mxu0
      %v545 = vpop.f32.mrf.mxu0
      %v546 = vadd.f32 %v377, %v545
      %v547 = vpop.f32.mrf.mxu0
      %548 = vmatprep.mubr.bf16.mxu0 0
      %549 = vmatmul.mubr.bf16.gmra.mxu0 %v475
      %v550 = vpop.f32.mrf.mxu0
      %v551 = vadd.f32 %v382, %v550
      %v552 = vpop.f32.mrf.mxu0
      %v553 = vpop.f32.mrf.mxu0
      %v554 = vadd.f32 %v385, %v553
      %v555 = vpop.f32.mrf.mxu0
      %556 = vmatprep.mubr.bf16.mxu0 0
      %557 = vmatmul.mubr.bf16.gmra.mxu0 %v478
      %v558 = vpop.f32.mrf.mxu0
      %v559 = vadd.f32 %v390, %v558
      %v560 = vpop.f32.mrf.mxu0
      %v561 = vpop.f32.mrf.mxu0
      %v562 = vadd.f32 %v393, %v561
      %v563 = vpop.f32.mrf.mxu0
      %564 = vmatprep.mubr.bf16.mxu0 0
      %565 = vmatmul.mubr.bf16.gmra.mxu0 %v481
      %v566 = vpop.f32.mrf.mxu0
      %v567 = vadd.f32 %v398, %v566
      %v568 = vpop.f32.mrf.mxu0
      %v569 = vpop.f32.mrf.mxu0
      %v570 = vadd.f32 %v401, %v569
      %v571 = vpop.f32.mrf.mxu0
      %572 = vmatprep.mubr.bf16.mxu0 0
      %573 = vmatmul.mubr.bf16.gmra.mxu0 %v484
      %v574 = vpop.f32.mrf.mxu0
      %v575 = vadd.f32 %v406, %v574
      %v576 = vpop.f32.mrf.mxu0
      %v577 = vpop.f32.mrf.mxu0
      %v578 = vadd.f32 %v409, %v577
      %v579 = vpop.f32.mrf.mxu0
      %580 = vmatprep.mubr.bf16.mxu0 0
      %581 = vmatmul.mubr.bf16.gmra.mxu0 %v487
      %v582 = vpop.f32.mrf.mxu0
      %v583 = vadd.f32 %v414, %v582
      %v584 = vpop.f32.mrf.mxu0
      %v585 = vpop.f32.mrf.mxu0
      %v586 = vadd.f32 %v417, %v585
      %v587 = vpop.f32.mrf.mxu0
      %588 = vdwg.mxu0
      %s589 = scalar_lea.vmem %s198, 16
      %v590 = vld [vmem:[%s589] sm:$0xf]
      %v591 = vld [vmem:[%s589 + $0x4] sm:$0xf]
      %v592 = vld [vmem:[%s589 + $0x8] sm:$0xf]
      %v593 = vld [vmem:[%s589 + $0xc] sm:$0xf]
      %v594 = vld [vmem:[%s589 + $0x10] sm:$0xf]
      %v595 = vld [vmem:[%s589 + $0x14] sm:$0xf]
      %v596 = vld [vmem:[%s589 + $0x18] sm:$0xf]
      %v597 = vld [vmem:[%s589 + $0x1c] sm:$0xf]
      %v598 = vld [vmem:[%s589 + $0x20] sm:$0xf]
      %v599 = vld [vmem:[%s589 + $0x24] sm:$0xf]
      %v600 = vld [vmem:[%s589 + $0x28] sm:$0xf]
      %v601 = vld [vmem:[%s589 + $0x2c] sm:$0xf]
      %v602 = vld [vmem:[%s589 + $0x30] sm:$0xf]
      %v603 = vld [vmem:[%s589 + $0x34] sm:$0xf]
      %v604 = vld [vmem:[%s589 + $0x38] sm:$0xf]
      %v605 = vld [vmem:[%s589 + $0x3c] sm:$0xf]
      %s606 = scalar_lea.vmem %s1, 16
      %v607 = vld [vmem:[%s606] sm:$0xf]
      %v608 = vld [vmem:[%s606 + $0x4] sm:$0x3]
      %v625 = vunpack.c.l.b16 %v590
      %v626 = vunpack.c.l.b16 %v591
      %v627 = vunpack.c.l.b16 %v592
      %v628 = vunpack.c.l.b16 %v593
      %v629 = vunpack.c.l.b16 %v594
      %v630 = vunpack.c.l.b16 %v595
      %v631 = vunpack.c.l.b16 %v596
      %v632 = vunpack.c.l.b16 %v597
      %v633 = vunpack.c.l.b16 %v598
      %v634 = vunpack.c.l.b16 %v599
      %v635 = vunpack.c.l.b16 %v600
      %v636 = vunpack.c.l.b16 %v601
      %v637 = vunpack.c.l.b16 %v602
      %v638 = vunpack.c.l.b16 %v603
      %v639 = vunpack.c.l.b16 %v604
      %v640 = vunpack.c.l.b16 %v605
      %v641 = vpack.c.b16 %v626, %v625
      %v642 = vpack.c.b16 %v628, %v627
      %v643 = vpack.c.b16 %v630, %v629
      %v644 = vpack.c.b16 %v632, %v631
      %v645 = vpack.c.b16 %v634, %v633
      %v646 = vpack.c.b16 %v636, %v635
      %v647 = vpack.c.b16 %v638, %v637
      %v648 = vpack.c.b16 %v640, %v639
      %v651 = vunpack.c.l.b16 %v607
      %v652 = vunpack.c.l.b16 %v608
      %v653 = vpack.c.b16 %v652, %v651
      %v655 = vsel %vm294, %v641, 0
      %v658 = vsel %vm294, %v642, 0
      %v661 = vsel %vm294, %v643, 0
      %v664 = vsel %vm294, %v644, 0
      %v667 = vsel %vm294, %v645, 0
      %v670 = vsel %vm294, %v646, 0
      %v673 = vsel %vm294, %v647, 0
      %v676 = vsel %vm294, %v648, 0
      %v679 = vsel %vm319, %v653, 0
      %681 = vmatprep.subr.bf16.mxu0 0
      %682 = vmatpush1.bf16.msra.mxu0 0
      %683 = vmatprep.subr.bf16.mxu0 0
      %684 = vmatpush1.bf16.msra.mxu0 0
      %685 = vmatprep.subr.bf16.mxu0 0
      %686 = vmatpush1.bf16.msra.mxu0 0
      %687 = vmatprep.subr.bf16.mxu0 0
      %688 = vmatpush1.bf16.msra.mxu0 0
      %689 = vmatprep.subr.bf16.mxu0 0
      %690 = vmatpush1.bf16.msra.mxu0 0
      %691 = vmatprep.subr.bf16.mxu0 0
      %692 = vmatpush1.bf16.msra.mxu0 0
      %693 = vmatprep.subr.bf16.mxu0 0
      %694 = vmatpush1.bf16.msra.mxu0 0
      %695 = vmatprep.subr.bf16.mxu0 0
      %696 = vmatpush1.bf16.msra.mxu0 %v679
      %697 = vmatprep.subr.bf16.mxu0 0
      %698 = vmatpush2.bf16.msra.mxu0 0
      %699 = vmatprep.subr.bf16.mxu0 0
      %700 = vmatpush2.bf16.msra.mxu0 0
      %701 = vmatprep.subr.bf16.mxu0 0
      %702 = vmatpush2.bf16.msra.mxu0 0
      %703 = vmatprep.subr.bf16.mxu0 0
      %704 = vmatpush2.bf16.msra.mxu0 0
      %705 = vmatprep.subr.bf16.mxu0 0
      %706 = vmatpush2.bf16.msra.mxu0 0
      %707 = vmatprep.subr.bf16.mxu0 0
      %708 = vmatpush2.bf16.msra.mxu0 0
      %709 = vmatprep.subr.bf16.mxu0 0
      %710 = vmatpush2.bf16.msra.mxu0 0
      %711 = vmatprep.subr.bf16.mxu0 0
      %712 = vmatpush2.bf16.msra.mxu0 0
      %713 = vmatprep.mubr.bf16.mxu0 0
      %714 = vmatmul.mubr.bf16.gmra.mxu0 %v655
      %v715 = vpop.f32.mrf.mxu0
      %v716 = vadd.f32 0.0, %v715
      %v717 = vpop.f32.mrf.mxu0
      %v718 = vpop.f32.mrf.mxu0
      %v719 = vadd.f32 0.0, %v718
      %v720 = vpop.f32.mrf.mxu0
      %721 = vmatprep.mubr.bf16.mxu0 0
      %722 = vmatmul.mubr.bf16.gmra.mxu0 %v658
      %v723 = vpop.f32.mrf.mxu0
      %v724 = vadd.f32 0.0, %v723
      %v725 = vpop.f32.mrf.mxu0
      %v726 = vpop.f32.mrf.mxu0
      %v727 = vadd.f32 0.0, %v726
      %v728 = vpop.f32.mrf.mxu0
      %729 = vmatprep.mubr.bf16.mxu0 0
      %730 = vmatmul.mubr.bf16.gmra.mxu0 %v661
      %v731 = vpop.f32.mrf.mxu0
      %v732 = vadd.f32 0.0, %v731
      %v733 = vpop.f32.mrf.mxu0
      %v734 = vpop.f32.mrf.mxu0
      %v735 = vadd.f32 0.0, %v734
      %v736 = vpop.f32.mrf.mxu0
      %737 = vmatprep.mubr.bf16.mxu0 0
      %738 = vmatmul.mubr.bf16.gmra.mxu0 %v664
      %v739 = vpop.f32.mrf.mxu0
      %v740 = vadd.f32 0.0, %v739
      %v741 = vpop.f32.mrf.mxu0
      %v742 = vpop.f32.mrf.mxu0
      %v743 = vadd.f32 0.0, %v742
      %v744 = vpop.f32.mrf.mxu0
      %745 = vmatprep.mubr.bf16.mxu0 0
      %746 = vmatmul.mubr.bf16.gmra.mxu0 %v667
      %v747 = vpop.f32.mrf.mxu0
      %v748 = vadd.f32 0.0, %v747
      %v749 = vpop.f32.mrf.mxu0
      %v750 = vpop.f32.mrf.mxu0
      %v751 = vadd.f32 0.0, %v750
      %v752 = vpop.f32.mrf.mxu0
      %753 = vmatprep.mubr.bf16.mxu0 0
      %754 = vmatmul.mubr.bf16.gmra.mxu0 %v670
      %v755 = vpop.f32.mrf.mxu0
      %v756 = vadd.f32 0.0, %v755
      %v757 = vpop.f32.mrf.mxu0
      %v758 = vpop.f32.mrf.mxu0
      %v759 = vadd.f32 0.0, %v758
      %v760 = vpop.f32.mrf.mxu0
      %761 = vmatprep.mubr.bf16.mxu0 0
      %762 = vmatmul.mubr.bf16.gmra.mxu0 %v673
      %v763 = vpop.f32.mrf.mxu0
      %v764 = vadd.f32 0.0, %v763
      %v765 = vpop.f32.mrf.mxu0
      %v766 = vpop.f32.mrf.mxu0
      %v767 = vadd.f32 0.0, %v766
      %v768 = vpop.f32.mrf.mxu0
      %769 = vmatprep.mubr.bf16.mxu0 0
      %770 = vmatmul.mubr.bf16.gmra.mxu0 %v676
      %v771 = vpop.f32.mrf.mxu0
      %v772 = vadd.f32 0.0, %v771
      %v773 = vpop.f32.mrf.mxu0
      %v774 = vpop.f32.mrf.mxu0
      %v775 = vadd.f32 0.0, %v774
      %v776 = vpop.f32.mrf.mxu0
      %777 = vdwg.mxu0
      %v778 = vadd.f32 %v527, %v716
      %v779 = vadd.f32 %v530, %v719
      %v780 = vadd.f32 %v535, %v724
      %v781 = vadd.f32 %v538, %v727
      %v782 = vadd.f32 %v543, %v732
      %v783 = vadd.f32 %v546, %v735
      %v784 = vadd.f32 %v551, %v740
      %v785 = vadd.f32 %v554, %v743
      %v786 = vadd.f32 %v559, %v748
      %v787 = vadd.f32 %v562, %v751
      %v788 = vadd.f32 %v567, %v756
      %v789 = vadd.f32 %v570, %v759
      %v790 = vadd.f32 %v575, %v764
      %v791 = vadd.f32 %v578, %v767
      %v792 = vadd.f32 %v583, %v772
      %v793 = vadd.f32 %v586, %v775
      %v794 = vld [vmem:[%s2] sm:$0x1]
      %v795 = vlaneseq
      %v796 = vshrl.u32 %v795, 7
      %v797 = vsub.s32 0, %v796
      %v798 = vrot.slane %v794, %v797
      %v799 = vadd.f32 %v778, %v798
      %v800 = vadd.f32 %v779, %v798
      %v801 = vadd.f32 %v780, %v798
      %v802 = vadd.f32 %v781, %v798
      %v803 = vadd.f32 %v782, %v798
      %v804 = vadd.f32 %v783, %v798
      %v805 = vadd.f32 %v784, %v798
      %v806 = vadd.f32 %v785, %v798
      %v807 = vadd.f32 %v786, %v798
      %v808 = vadd.f32 %v787, %v798
      %v809 = vadd.f32 %v788, %v798
      %v810 = vadd.f32 %v789, %v798
      %v811 = vadd.f32 %v790, %v798
      %v812 = vadd.f32 %v791, %v798
      %v813 = vadd.f32 %v792, %v798
      %v814 = vadd.f32 %v793, %v798
      %v815 = vmul.f32 %v799, %v799
      %v816 = vmul.f32 %v800, %v800
      %v817 = vmul.f32 %v801, %v801
      %v818 = vmul.f32 %v802, %v802
      %v819 = vmul.f32 %v803, %v803
      %v820 = vmul.f32 %v804, %v804
      %v821 = vmul.f32 %v805, %v805
      %v822 = vmul.f32 %v806, %v806
      %v823 = vmul.f32 %v807, %v807
      %v824 = vmul.f32 %v808, %v808
      %v825 = vmul.f32 %v809, %v809
      %v826 = vmul.f32 %v810, %v810
      %v827 = vmul.f32 %v811, %v811
      %v828 = vmul.f32 %v812, %v812
      %v829 = vmul.f32 %v813, %v813
      %v830 = vmul.f32 %v814, %v814
      %vm831 = vcmask 64512
      %v832 = vsel %vm831, %v815, 0.0
      %833 = vadd.xlane.f32.xlu0 %v832
      %v834 = vpop.xlane.xlu0 %833
      %v835 = vsel %vm831, %v816, 0.0
      %836 = vadd.xlane.f32.xlu0 %v835
      %v837 = vpop.xlane.xlu0 %836
      %v838 = vsel %vm831, %v817, 0.0
      %839 = vadd.xlane.f32.xlu0 %v838
      %v840 = vpop.xlane.xlu0 %839
      %v841 = vsel %vm831, %v818, 0.0
      %842 = vadd.xlane.f32.xlu0 %v841
      %v843 = vpop.xlane.xlu0 %842
      %v844 = vsel %vm831, %v819, 0.0
      %845 = vadd.xlane.f32.xlu0 %v844
      %v846 = vpop.xlane.xlu0 %845
      %v847 = vsel %vm831, %v820, 0.0
      %848 = vadd.xlane.f32.xlu0 %v847
      %v849 = vpop.xlane.xlu0 %848
      %v850 = vsel %vm831, %v821, 0.0
      %851 = vadd.xlane.f32.xlu0 %v850
      %v852 = vpop.xlane.xlu0 %851
      %v853 = vsel %vm831, %v822, 0.0
      %854 = vadd.xlane.f32.xlu0 %v853
      %v855 = vpop.xlane.xlu0 %854
      %v856 = vsel %vm831, %v823, 0.0
      %857 = vadd.xlane.f32.xlu0 %v856
      %v858 = vpop.xlane.xlu0 %857
      %v859 = vsel %vm831, %v824, 0.0
      %860 = vadd.xlane.f32.xlu0 %v859
      %v861 = vpop.xlane.xlu0 %860
      %v862 = vsel %vm831, %v825, 0.0
      %863 = vadd.xlane.f32.xlu0 %v862
      %v864 = vpop.xlane.xlu0 %863
      %v865 = vsel %vm831, %v826, 0.0
      %866 = vadd.xlane.f32.xlu0 %v865
      %v867 = vpop.xlane.xlu0 %866
      %v868 = vsel %vm831, %v827, 0.0
      %869 = vadd.xlane.f32.xlu0 %v868
      %v870 = vpop.xlane.xlu0 %869
      %v871 = vsel %vm831, %v828, 0.0
      %872 = vadd.xlane.f32.xlu0 %v871
      %v873 = vpop.xlane.xlu0 %872
      %v874 = vsel %vm831, %v829, 0.0
      %875 = vadd.xlane.f32.xlu0 %v874
      %v876 = vpop.xlane.xlu0 %875
      %v877 = vsel %vm831, %v830, 0.0
      %878 = vadd.xlane.f32.xlu0 %v877
      %v879 = vpop.xlane.xlu0 %878
      %v880 = vmax.f32 %v834, 1e-24
      %v881 = vmax.f32 %v837, 1e-24
      %v882 = vmax.f32 %v840, 1e-24
      %v883 = vmax.f32 %v843, 1e-24
      %v884 = vmax.f32 %v846, 1e-24
      %v885 = vmax.f32 %v849, 1e-24
      %v886 = vmax.f32 %v852, 1e-24
      %v887 = vmax.f32 %v855, 1e-24
      %v888 = vmax.f32 %v858, 1e-24
      %v889 = vmax.f32 %v861, 1e-24
      %v890 = vmax.f32 %v864, 1e-24
      %v891 = vmax.f32 %v867, 1e-24
      %v892 = vmax.f32 %v870, 1e-24
      %v893 = vmax.f32 %v873, 1e-24
      %v894 = vmax.f32 %v876, 1e-24
      %v895 = vmax.f32 %v879, 1e-24
      %v896 = vrsqrt.pop %v880
      %v897 = vrsqrt.pop %v881
      %v898 = vrsqrt.pop %v882
      %v899 = vrsqrt.pop %v883
      %v900 = vrsqrt.pop %v884
      %v901 = vrsqrt.pop %v885
      %v902 = vrsqrt.pop %v886
      %v903 = vrsqrt.pop %v887
      %v904 = vrsqrt.pop %v888
      %v905 = vrsqrt.pop %v889
      %v906 = vrsqrt.pop %v890
      %v907 = vrsqrt.pop %v891
      %v908 = vrsqrt.pop %v892
      %v909 = vrsqrt.pop %v893
      %v910 = vrsqrt.pop %v894
      %v911 = vrsqrt.pop %v895
      %v912 = vmul.f32 %v799, %v896
      %v913 = vmul.f32 %v800, %v897
      %v914 = vmul.f32 %v801, %v898
      %v915 = vmul.f32 %v802, %v899
      %v916 = vmul.f32 %v803, %v900
      %v917 = vmul.f32 %v804, %v901
      %v918 = vmul.f32 %v805, %v902
      %v919 = vmul.f32 %v806, %v903
      %v920 = vmul.f32 %v807, %v904
      %v921 = vmul.f32 %v808, %v905
      %v922 = vmul.f32 %v809, %v906
      %v923 = vmul.f32 %v810, %v907
      %v924 = vmul.f32 %v811, %v908
      %v925 = vmul.f32 %v812, %v909
      %v926 = vmul.f32 %v813, %v910
      %v927 = vmul.f32 %v814, %v911
      %v928 = vld [vmem:[%s2 + $0x1] sm:$0x1]
      %v929 = vmul.f32 %v928, 2.828427
      %v930 = vlaneseq
      %v931 = vshrl.u32 %v930, 7
      %v932 = vsub.s32 0, %v931
      %v933 = vrot.slane %v929, %v932
      %v934 = vmul.f32 %v912, %v933
      %v935 = vmul.f32 %v913, %v933
      %v936 = vmul.f32 %v914, %v933
      %v937 = vmul.f32 %v915, %v933
      %v938 = vmul.f32 %v916, %v933
      %v939 = vmul.f32 %v917, %v933
      %v940 = vmul.f32 %v918, %v933
      %v941 = vmul.f32 %v919, %v933
      %v942 = vmul.f32 %v920, %v933
      %v943 = vmul.f32 %v921, %v933
      %v944 = vmul.f32 %v922, %v933
      %v945 = vmul.f32 %v923, %v933
      %v946 = vmul.f32 %v924, %v933
      %v947 = vmul.f32 %v925, %v933
      %v948 = vmul.f32 %v926, %v933
      %v949 = vmul.f32 %v927, %v933
      %v950 = vsub.f32 0.0, %v934
      %v951 = vsub.f32 0.0, %v935
      %v952 = vsub.f32 0.0, %v936
      %v953 = vsub.f32 0.0, %v937
      %v954 = vsub.f32 0.0, %v938
      %v955 = vsub.f32 0.0, %v939
      %v956 = vsub.f32 0.0, %v940
      %v957 = vsub.f32 0.0, %v941
      %v958 = vsub.f32 0.0, %v942
      %v959 = vsub.f32 0.0, %v943
      %v960 = vsub.f32 0.0, %v944
      %v961 = vsub.f32 0.0, %v945
      %v962 = vsub.f32 0.0, %v946
      %v963 = vsub.f32 0.0, %v947
      %v964 = vsub.f32 0.0, %v948
      %v965 = vsub.f32 0.0, %v949
      %v966 = vmul.f32 %v950, 1.442695
      %v967 = vpow.pop %v966
      %v968 = vmul.f32 %v951, 1.442695
      %v969 = vpow.pop %v968
      %v970 = vmul.f32 %v952, 1.442695
      %v971 = vpow.pop %v970
      %v972 = vmul.f32 %v953, 1.442695
      %v973 = vpow.pop %v972
      %v974 = vmul.f32 %v954, 1.442695
      %v975 = vpow.pop %v974
      %v976 = vmul.f32 %v955, 1.442695
      %v977 = vpow.pop %v976
      %v978 = vmul.f32 %v956, 1.442695
      %v979 = vpow.pop %v978
      %v980 = vmul.f32 %v957, 1.442695
      %v981 = vpow.pop %v980
      %v982 = vmul.f32 %v958, 1.442695
      %v983 = vpow.pop %v982
      %v984 = vmul.f32 %v959, 1.442695
      %v985 = vpow.pop %v984
      %v986 = vmul.f32 %v960, 1.442695
      %v987 = vpow.pop %v986
      %v988 = vmul.f32 %v961, 1.442695
      %v989 = vpow.pop %v988
      %v990 = vmul.f32 %v962, 1.442695
      %v991 = vpow.pop %v990
      %v992 = vmul.f32 %v963, 1.442695
      %v993 = vpow.pop %v992
      %v994 = vmul.f32 %v964, 1.442695
      %v995 = vpow.pop %v994
      %v996 = vmul.f32 %v965, 1.442695
      %v997 = vpow.pop %v996
      %v998 = vadd.f32 %v967, 1.0
      %v999 = vadd.f32 %v969, 1.0
      %v1000 = vadd.f32 %v971, 1.0
      %v1001 = vadd.f32 %v973, 1.0
      %v1002 = vadd.f32 %v975, 1.0
      %v1003 = vadd.f32 %v977, 1.0
      %v1004 = vadd.f32 %v979, 1.0
      %v1005 = vadd.f32 %v981, 1.0
      %v1006 = vadd.f32 %v983, 1.0
      %v1007 = vadd.f32 %v985, 1.0
      %v1008 = vadd.f32 %v987, 1.0
      %v1009 = vadd.f32 %v989, 1.0
      %v1010 = vadd.f32 %v991, 1.0
      %v1011 = vadd.f32 %v993, 1.0
      %v1012 = vadd.f32 %v995, 1.0
      %v1013 = vadd.f32 %v997, 1.0
      %v1014 = vrcp.pop %v998
      %v1015 = vrcp.pop %v999
      %v1016 = vrcp.pop %v1000
      %v1017 = vrcp.pop %v1001
      %v1018 = vrcp.pop %v1002
      %v1019 = vrcp.pop %v1003
      %v1020 = vrcp.pop %v1004
      %v1021 = vrcp.pop %v1005
      %v1022 = vrcp.pop %v1006
      %v1023 = vrcp.pop %v1007
      %v1024 = vrcp.pop %v1008
      %v1025 = vrcp.pop %v1009
      %v1026 = vrcp.pop %v1010
      %v1027 = vrcp.pop %v1011
      %v1028 = vrcp.pop %v1012
      %v1029 = vrcp.pop %v1013
      %v1030 = vmul.f32 %v934, %v1014
      %v1031 = vmul.f32 %v935, %v1015
      %v1032 = vmul.f32 %v936, %v1016
      %v1033 = vmul.f32 %v937, %v1017
      %v1034 = vmul.f32 %v938, %v1018
      %v1035 = vmul.f32 %v939, %v1019
      %v1036 = vmul.f32 %v940, %v1020
      %v1037 = vmul.f32 %v941, %v1021
      %v1038 = vmul.f32 %v942, %v1022
      %v1039 = vmul.f32 %v943, %v1023
      %v1040 = vmul.f32 %v944, %v1024
      %v1041 = vmul.f32 %v945, %v1025
      %v1042 = vmul.f32 %v946, %v1026
      %v1043 = vmul.f32 %v947, %v1027
      %v1044 = vmul.f32 %v948, %v1028
      %v1045 = vmul.f32 %v949, %v1029
      %1046 = vst.msk [vmem:[%s208] sm:$0xff] %vm831, %v1030
      %1047 = vst.msk [vmem:[%s208 + $0x8] sm:$0xff] %vm831, %v1031
      %1048 = vst.msk [vmem:[%s208 + $0x10] sm:$0xff] %vm831, %v1032
      %1049 = vst.msk [vmem:[%s208 + $0x18] sm:$0xff] %vm831, %v1033
      %1050 = vst.msk [vmem:[%s208 + $0x20] sm:$0xff] %vm831, %v1034
      %1051 = vst.msk [vmem:[%s208 + $0x28] sm:$0xff] %vm831, %v1035
      %1052 = vst.msk [vmem:[%s208 + $0x30] sm:$0xff] %vm831, %v1036
      %1053 = vst.msk [vmem:[%s208 + $0x38] sm:$0xff] %vm831, %v1037
      %1054 = vst.msk [vmem:[%s208 + $0x40] sm:$0xff] %vm831, %v1038
      %1055 = vst.msk [vmem:[%s208 + $0x48] sm:$0xff] %vm831, %v1039
      %1056 = vst.msk [vmem:[%s208 + $0x50] sm:$0xff] %vm831, %v1040
      %1057 = vst.msk [vmem:[%s208 + $0x58] sm:$0xff] %vm831, %v1041
      %1058 = vst.msk [vmem:[%s208 + $0x60] sm:$0xff] %vm831, %v1042
      %1059 = vst.msk [vmem:[%s208 + $0x68] sm:$0xff] %vm831, %v1043
      %1060 = vst.msk [vmem:[%s208 + $0x70] sm:$0xff] %vm831, %v1044
      %1061 = vst.msk [vmem:[%s208 + $0x78] sm:$0xff] %vm831, %v1045
      %s1062 = smul.u32 8, %s19
      %p1063 = scmp.lt.s32.totalorder %s18, 1
      %s1064 = scalar_select %p1063, %s18, 1
      %p1065 = scmp.lt.s32.totalorder %s1062, 15
      %s1066 = scalar_select %p1065, %s1062, 15
      %s1067 = smul.addr %s1066, 2
      %s1068 = smul.addr %s1064, 32
      %s1069 = sadd.s32 %s1067, %s1068
      %s1070 = smul.addr %s1069, 8
      %s1071 = scalar_lea.vmem %s3, %s1070
      // Predicated region
      $region33: #{tpu_custom_call.1} parent=31 // pred_check
        %p1072 = pneg %p116
      $region34: #{tpu_custom_call.1} parent=31 // pred_check_branch
        %1074 = sbr.rel (%p1072) target = $region36
      $region35: #{tpu_custom_call.1} parent=31 // pred_region
        %s1075 = smul.u32 8, %s19
      $region36: #{tpu_custom_call.1} parent=31 // pred_fallthru
        _
    $region32: #{tpu_custom_call.1} parent=5 // pred_fallthru
      _
    %p1076 = scmp.le.s32.totalorder 2, %s9
    // Predicated region
    $region37: #{tpu_custom_call.1} parent=5 // pred_check
      %p1077 = pneg %p1076
    $region38: #{tpu_custom_call.1} parent=5 // pred_check_branch
      %1079 = sbr.rel (%p1077) target = $region40
    $region39: #{tpu_custom_call.1} parent=5 // pred_region
      %s1080 = ssub.s32 %s9, 2
      // Predicated region
      $region41: #{tpu_custom_call.1} parent=39 // pred_check
        %p1081 = pneg %p122
      $region42: #{tpu_custom_call.1} parent=39 // pred_check_branch
        %1083 = sbr.rel (%p1081) target = $region44
      $region43: #{tpu_custom_call.1} parent=39 // pred_region
        %s1084 = smul.u32 8, %s21
        %p1085 = scmp.lt.s32.totalorder %s20, 1
        %s1086 = scalar_select %p1085, %s20, 1
        %p1087 = scmp.lt.s32.totalorder %s1084, 15
        %s1088 = scalar_select %p1087, %s1084, 15
        %s1089 = smul.addr %s1088, 2
        %s1090 = smul.addr %s1086, 32
        %s1091 = sadd.s32 %s1089, %s1090
        %s1092 = smul.addr %s1091, 8
        %s1093 = scalar_lea.vmem %s3, %s1092
      $region44: #{tpu_custom_call.1} parent=39 // pred_fallthru
        _
    $region40: #{tpu_custom_call.1} parent=5 // pred_fallthru
      _
  $region6: #{tpu_custom_call.1} parent=0 // loop_footer
    %s13 = sadd.s32 1, %s9
  $region7: #{tpu_custom_call.1} parent=0 // loop_footer_branch
    %8 = sbr.rel target = $region3
  $region8: #{tpu_custom_call.1} parent=0 // loop_exit
    _

</llo_original>
